<compile_context>
chip_gen: v6e
topology: v6e:2x2x1
jax: 0.10.0
libtpu: 0.0.40
codegen_flags: <defaults>
</compile_context>

<pallas_src>
import functools
import math

import jax
import jax.numpy as jnp
from jax import lax
from jax.experimental import pallas as pl
from jax.experimental.pallas import tpu as pltpu

_INV_SQRT2 = 1.0 / math.sqrt(2.0)


def _gelu_exact(h):
    # torch.nn.functional.gelu default: 0.5 * x * (1 + erf(x / sqrt(2)))
    return 0.5 * h * (1.0 + lax.erf(h * _INV_SQRT2))


def _make_fused_kernel(n_layers, filters, compute_dtype):
    """Fused kernel: all residual layers + output projection in one body.

    Ref order: (x_ref, w_cat_0, b_0, ..., w_cat_{L-1}, b_{L-1}, w_out, o_ref)
    w_cat_i = [W_i | W_res_i]  of shape (d_in_i, 2*filters).
    dropout=0 and norm=None are identities in this configuration.
    """

    def kernel(x_ref, *refs):
        o_ref = refs[-1]
        w_out_ref = refs[-2]

        a = x_ref[...]                                 # (tile, d_in), compute_dtype
        for i in range(n_layers):
            w_cat = refs[2 * i][...]                   # (d_in_i, 2F), compute_dtype
            b = refs[2 * i + 1][...]                   # (1, F), f32
            # One lane-dense, 128-lane-wide MXU matmul per layer; f32 accumulate.
            z = jnp.dot(a, w_cat, preferred_element_type=jnp.float32)
            # gelu only over the `filters` lanes that need it (halves the
            # exact-erf VALU cost); the residual path is the upper half of the
            # same matmul result.  Both slices are static.
            act = _gelu_exact(z[:, :filters] + b)      # (tile, F), f32 VPU math
            a = (act + z[:, filters:]).astype(compute_dtype)
        # Narrow out_dim-lane store: masked vst, but 8x less HBM writeback than
        # a 128-lane padded f32 store, and no post-call lane slice needed.
        o_ref[...] = jnp.dot(a, w_out_ref[...],
                             preferred_element_type=jnp.float32
                             ).astype(o_ref.dtype)

    return kernel


def _pack_params(params, compute_dtype):
    """Concatenate [W | W_res] per layer; keep biases in f32 for VPU math."""
    layer_ws, layer_bs = [], []
    for (w, b, w_res) in params["layers"]:
        layer_ws.append(jnp.concatenate([w, w_res], axis=1).astype(compute_dtype))
        layer_bs.append(b.reshape(1, -1).astype(jnp.float32))
    w_out = params["w_out"].astype(compute_dtype)      # (F, out_dim)
    return layer_ws, layer_bs, w_out


def scalar_mlp_forward(x, params, *, filters, compute_dtype=jnp.bfloat16,
                       out_dtype=jnp.float32, tile_n=4096):
    """Full scalarMLP forward (same_depth=False path) as one pallas_call."""
    n, d_in = x.shape
    out_dim = params["w_out"].shape[1]
    layer_ws, layer_bs, w_out = _pack_params(params, compute_dtype)
    n_layers = len(layer_ws)

    # Row tile: multiple of the sublane packing (16 for bf16, 8 for f32);
    # large default amortizes per-grid-step overhead, small N collapses to one
    # full-size tile.
    sub = 8 * (4 // jnp.dtype(compute_dtype).itemsize)
    tile = min(tile_n, pl.cdiv(n, sub) * sub)
    tile = max(sub, pl.cdiv(tile, sub) * sub)
    n_padded = pl.cdiv(n, tile) * tile

    xin = x.astype(compute_dtype)
    if n_padded != n:
        xin = jnp.pad(xin, ((0, n_padded - n), (0, 0)))
    grid = (n_padded // tile,)

    in_specs = [pl.BlockSpec((tile, d_in), lambda i: (i, 0))]
    operands = [xin]
    for w, b in zip(layer_ws, layer_bs):
        in_specs.append(pl.BlockSpec(w.shape, lambda i: (0, 0)))   # resident
        operands.append(w)
        in_specs.append(pl.BlockSpec(b.shape, lambda i: (0, 0)))   # resident
        operands.append(b)
    in_specs.append(pl.BlockSpec(w_out.shape, lambda i: (0, 0)))   # resident
    operands.append(w_out)

    out = pl.pallas_call(
        _make_fused_kernel(n_layers, filters, compute_dtype),
        out_shape=jax.ShapeDtypeStruct((n_padded, out_dim), out_dtype),
        grid=grid,
        in_specs=in_specs,
        out_specs=pl.BlockSpec((tile, out_dim), lambda i: (i, 0)),
        compiler_params=pltpu.CompilerParams(
            dimension_semantics=("parallel",),
            # Safe on every generation (v5e default scoped is only 16 MiB;
            # v7x physical is 64 MiB so do not request more than 32 MiB).
            vmem_limit_bytes=32 * 1024 * 1024),
    )(*operands)
    # Only the row-pad trim remains (16-lane array, lazy slice); no extra
    # lane-slice HBM pass.
    return out if n_padded == n else out[:n]


def scalar_mlp_reference(x, params):
    """Pure-JAX f32 reference of the same math for validation."""
    for (w, b, w_res) in params["layers"]:
        res = x @ w_res
        h = x @ w + b
        x = res + jax.nn.gelu(h, approximate=False)
    return x @ params["w_out"]


def init_params(key, layers, filters, input_dim, output_dim):
    # ramp_depth=False: filter schedule [input_dim] + [filters]*layers
    n_filters = [input_dim] + [filters] * layers
    s_in, s_out = n_filters[:-1], n_filters[1:]
    params = {"layers": []}
    for i in range(layers):
        key, k1, k2, k3 = jax.random.split(key, 4)
        bound = 1.0 / math.sqrt(s_in[i])
        w = jax.random.uniform(k1, (s_in[i], s_out[i]), jnp.float32, -bound, bound)
        b = jax.random.uniform(k2, (1, s_out[i]), jnp.float32, -bound, bound)
        w_res = jax.random.uniform(k3, (s_in[i], s_out[i]), jnp.float32, -bound, bound)
        params["layers"].append((w, b, w_res))
    key, k4 = jax.random.split(key)
    bound = 1.0 / math.sqrt(s_out[-1])
    params["w_out"] = jax.random.uniform(
        k4, (s_out[-1], output_dim), jnp.float32, -bound, bound)
    return params


if __name__ == "__main__":
    # Small, module-consistent shapes.
    N = 24            # number of "nodes" / batch rows
    LAYERS = 2
    FILTERS = 64
    INPUT_DIM = 32
    OUTPUT_DIM = 16

    key = jax.random.PRNGKey(0)
    key, kx = jax.random.split(key)
    x = jax.random.normal(kx, (N, INPUT_DIM), jnp.float32)

    params = init_params(key, LAYERS, FILTERS, INPUT_DIM, OUTPUT_DIM)
    y_ref = scalar_mlp_reference(x, params)

    # f32 compute path with a tiny row tile so the multi-step grid pipeline is
    # exercised (3 grid steps for N=24).
    fwd_f32 = functools.partial(scalar_mlp_forward, filters=FILTERS,
                                compute_dtype=jnp.float32, tile_n=8)
    y = jax.block_until_ready(fwd_f32(x, params))
    assert y.shape == (N, OUTPUT_DIM)
    assert jnp.allclose(y, y_ref, atol=1e-4, rtol=1e-4), "f32 mismatch vs JAX reference"

    # Default path: bf16 MXU operands / HBM streams (v6e & v7x bandwidth win),
    # f32 accumulation and f32 elementwise math, f32 output.
    fwd_bf16 = functools.partial(scalar_mlp_forward, filters=FILTERS)
    y_bf16 = jax.block_until_ready(fwd_bf16(x, params))
    assert y_bf16.shape == (N, OUTPUT_DIM)
    assert jnp.allclose(y_bf16, y_ref, atol=5e-2, rtol=5e-2), "bf16 mismatch vs JAX reference"

    print("KERNEL_OK")
</pallas_src>

<mosaic_0001>
module attributes {stable_mosaic.version = 11 : i64} {
  func.func @kernel(%arg0: i32, %arg1: memref<8x32xf32, #tpu.memory_space<vmem>>, %arg2: memref<32x128xf32, #tpu.memory_space<vmem>>, %arg3: memref<1x64xf32, #tpu.memory_space<vmem>>, %arg4: memref<64x128xf32, #tpu.memory_space<vmem>>, %arg5: memref<1x64xf32, #tpu.memory_space<vmem>>, %arg6: memref<64x16xf32, #tpu.memory_space<vmem>>, %arg7: memref<8x16xf32, #tpu.memory_space<vmem>>) attributes {dimension_semantics = [#tpu.dimension_semantics<parallel>], iteration_bounds = array<i64: 3>, scalar_prefetch = 0 : i64, scratch_operands = 0 : i64, tpu.core_type = #tpu.core_type<tc>, window_params = [{transform_indices = @transform_0, window_bounds = array<i64: 8, 32>}, {pipeline_mode = #tpu.pipeline_mode<synchronous>, transform_indices = @transform_1, window_bounds = array<i64: 32, 128>}, {pipeline_mode = #tpu.pipeline_mode<synchronous>, transform_indices = @transform_2, window_bounds = array<i64: 1, 64>}, {pipeline_mode = #tpu.pipeline_mode<synchronous>, transform_indices = @transform_3, window_bounds = array<i64: 64, 128>}, {pipeline_mode = #tpu.pipeline_mode<synchronous>, transform_indices = @transform_4, window_bounds = array<i64: 1, 64>}, {pipeline_mode = #tpu.pipeline_mode<synchronous>, transform_indices = @transform_5, window_bounds = array<i64: 64, 16>}, {transform_indices = @transform_6, window_bounds = array<i64: 8, 16>}]} {
    %c0 = arith.constant 0 : index
    %c0_0 = arith.constant 0 : index
    %0 = vector.load %arg1[%c0, %c0_0] : memref<8x32xf32, #tpu.memory_space<vmem>>, vector<8x32xf32>
    %c0_1 = arith.constant 0 : index
    %c0_2 = arith.constant 0 : index
    %1 = vector.load %arg2[%c0_1, %c0_2] : memref<32x128xf32, #tpu.memory_space<vmem>>, vector<32x128xf32>
    %c0_3 = arith.constant 0 : index
    %c0_4 = arith.constant 0 : index
    %2 = vector.load %arg3[%c0_3, %c0_4] : memref<1x64xf32, #tpu.memory_space<vmem>>, vector<1x64xf32>
    %cst = arith.constant dense<0.000000e+00> : vector<8x128xf32>
    %3 = tpu.matmul %0, %1, %cst {dimension_numbers = #tpu.dot_dimension_numbers<[1], [0], [0], [1], [0, 0, 1, 1], [], []>} : vector<8x32xf32>, vector<32x128xf32>, vector<8x128xf32> -> vector<8x128xf32>
    %4 = vector.extract_strided_slice %3 {offsets = [0, 0], sizes = [8, 64], strides = [1, 1]} : vector<8x128xf32> to vector<8x64xf32>
    %5 = vector.broadcast %2 : vector<1x64xf32> to vector<8x64xf32>
    %6 = arith.addf %4, %5 : vector<8x64xf32>
    %cst_5 = arith.constant 5.000000e-01 : f32
    %7 = vector.broadcast %cst_5 : f32 to vector<8x64xf32>
    %8 = arith.mulf %7, %6 : vector<8x64xf32>
    %cst_6 = arith.constant 0.707106769 : f32
    %9 = vector.broadcast %cst_6 : f32 to vector<8x64xf32>
    %10 = arith.mulf %6, %9 : vector<8x64xf32>
    %11 = math.erf %10 : vector<8x64xf32>
    %cst_7 = arith.constant 1.000000e+00 : f32
    %12 = vector.broadcast %cst_7 : f32 to vector<8x64xf32>
    %13 = arith.addf %12, %11 : vector<8x64xf32>
    %14 = arith.mulf %8, %13 : vector<8x64xf32>
    %15 = vector.extract_strided_slice %3 {offsets = [0, 64], sizes = [8, 64], strides = [1, 1]} : vector<8x128xf32> to vector<8x64xf32>
    %16 = arith.addf %14, %15 : vector<8x64xf32>
    %c0_8 = arith.constant 0 : index
    %c0_9 = arith.constant 0 : index
    %17 = vector.load %arg4[%c0_8, %c0_9] : memref<64x128xf32, #tpu.memory_space<vmem>>, vector<64x128xf32>
    %c0_10 = arith.constant 0 : index
    %c0_11 = arith.constant 0 : index
    %18 = vector.load %arg5[%c0_10, %c0_11] : memref<1x64xf32, #tpu.memory_space<vmem>>, vector<1x64xf32>
    %cst_12 = arith.constant dense<0.000000e+00> : vector<8x128xf32>
    %19 = tpu.matmul %16, %17, %cst_12 {dimension_numbers = #tpu.dot_dimension_numbers<[1], [0], [0], [1], [0, 0, 1, 1], [], []>} : vector<8x64xf32>, vector<64x128xf32>, vector<8x128xf32> -> vector<8x128xf32>
    %20 = vector.extract_strided_slice %19 {offsets = [0, 0], sizes = [8, 64], strides = [1, 1]} : vector<8x128xf32> to vector<8x64xf32>
    %21 = vector.broadcast %18 : vector<1x64xf32> to vector<8x64xf32>
    %22 = arith.addf %20, %21 : vector<8x64xf32>
    %cst_13 = arith.constant 5.000000e-01 : f32
    %23 = vector.broadcast %cst_13 : f32 to vector<8x64xf32>
    %24 = arith.mulf %23, %22 : vector<8x64xf32>
    %cst_14 = arith.constant 0.707106769 : f32
    %25 = vector.broadcast %cst_14 : f32 to vector<8x64xf32>
    %26 = arith.mulf %22, %25 : vector<8x64xf32>
    %27 = math.erf %26 : vector<8x64xf32>
    %cst_15 = arith.constant 1.000000e+00 : f32
    %28 = vector.broadcast %cst_15 : f32 to vector<8x64xf32>
    %29 = arith.addf %28, %27 : vector<8x64xf32>
    %30 = arith.mulf %24, %29 : vector<8x64xf32>
    %31 = vector.extract_strided_slice %19 {offsets = [0, 64], sizes = [8, 64], strides = [1, 1]} : vector<8x128xf32> to vector<8x64xf32>
    %32 = arith.addf %30, %31 : vector<8x64xf32>
    %c0_16 = arith.constant 0 : index
    %c0_17 = arith.constant 0 : index
    %33 = vector.load %arg6[%c0_16, %c0_17] : memref<64x16xf32, #tpu.memory_space<vmem>>, vector<64x16xf32>
    %cst_18 = arith.constant dense<0.000000e+00> : vector<8x16xf32>
    %34 = tpu.matmul %32, %33, %cst_18 {dimension_numbers = #tpu.dot_dimension_numbers<[1], [0], [0], [1], [0, 0, 1, 1], [], []>} : vector<8x64xf32>, vector<64x16xf32>, vector<8x16xf32> -> vector<8x16xf32>
    %c0_19 = arith.constant 0 : index
    %c0_20 = arith.constant 0 : index
    %35 = vector.load %arg7[%c0_19, %c0_20] : memref<8x16xf32, #tpu.memory_space<vmem>>, vector<8x16xf32>
    tpu.vector_store %arg7[%c0_19, %c0_20], %34 {strides = array<i32>} : memref<8x16xf32, #tpu.memory_space<vmem>>, vector<8x16xf32>,
    return
  }
  func.func @transform_0(%arg0: i32) -> (i32, i32) {
    %c0_i32 = arith.constant 0 : i32
    %c0_i32_0 = arith.constant 0 : i32
    return %arg0, %c0_i32 : i32, i32
  }
  func.func @transform_1(%arg0: i32) -> (i32, i32) {
    %c0_i32 = arith.constant 0 : i32
    %c0_i32_0 = arith.constant 0 : i32
    %c0_i32_1 = arith.constant 0 : i32
    return %c0_i32, %c0_i32_0 : i32, i32
  }
  func.func @transform_2(%arg0: i32) -> (i32, i32) {
    %c0_i32 = arith.constant 0 : i32
    %c0_i32_0 = arith.constant 0 : i32
    %c0_i32_1 = arith.constant 0 : i32
    return %c0_i32, %c0_i32_0 : i32, i32
  }
  func.func @transform_3(%arg0: i32) -> (i32, i32) {
    %c0_i32 = arith.constant 0 : i32
    %c0_i32_0 = arith.constant 0 : i32
    %c0_i32_1 = arith.constant 0 : i32
    return %c0_i32, %c0_i32_0 : i32, i32
  }
  func.func @transform_4(%arg0: i32) -> (i32, i32) {
    %c0_i32 = arith.constant 0 : i32
    %c0_i32_0 = arith.constant 0 : i32
    %c0_i32_1 = arith.constant 0 : i32
    return %c0_i32, %c0_i32_0 : i32, i32
  }
  func.func @transform_5(%arg0: i32) -> (i32, i32) {
    %c0_i32 = arith.constant 0 : i32
    %c0_i32_0 = arith.constant 0 : i32
    %c0_i32_1 = arith.constant 0 : i32
    return %c0_i32, %c0_i32_0 : i32, i32
  }
  func.func @transform_6(%arg0: i32) -> (i32, i32) {
    %c0_i32 = arith.constant 0 : i32
    %c0_i32_0 = arith.constant 0 : i32
    return %arg0, %c0_i32 : i32, i32
  }
}

</mosaic_0001>

<llo_original>
// kernel: tpu_custom_call.1
$region0: #{tpu_custom_call.1}
  #allocation0 [shape = 'u32[]', space=smem, size = 0x4, offset = 0x4, fixed_abs, tag = 'smem constant byte address 0x4 - core index']
  #allocation1 [shape = 'u32[144,128]{1,0:T(1,128)}', space=vmem, size = 0x12000, scoped, tag = 'internal scratch']
  %s0 = inlined_call_operand.hbm [shape: f32[24,32], index: 0, kind: input, shape index: {}]
  %s1 = inlined_call_operand.hbm [shape: f32[32,128], index: 1, kind: input, shape index: {}]
  %s2 = inlined_call_operand.vmem [shape: f32[1,64], index: 2, kind: input, shape index: {}]
  %s3 = inlined_call_operand.vmem [shape: f32[64,128], index: 3, kind: input, shape index: {}]
  %s4 = inlined_call_operand.vmem [shape: f32[1,64], index: 4, kind: input, shape index: {}]
  %s5 = inlined_call_operand.vmem [shape: f32[64,16], index: 5, kind: input, shape index: {}]
  %s6 = inlined_call_operand.vmem [shape: f32[24,16], index: 6, kind: output, shape index: {}]
  %s7 = sld [smem:[#allocation0]]
  $region65: #{tpu_custom_call.1} parent=0
    _
  %s9 = ssub.s32 1, %s7
  %s10 = scalar_select 0, %s9, %s7
  $region1: #{tpu_custom_call.1} parent=0
    #allocation2 [shape = 'u8[8192]{0}', space=vmem, size = 0x2000, scoped, tag = 'input window, operand 0']
    #allocation3 [shape = 's32[2]{0}', space=sflag, size = 0x8, scoped, tag = 'scoped memory for tpu_custom_call.1']
    #allocation4 [shape = 'u8[16384]{0}', space=vmem, size = 0x4000, scoped, tag = 'input window, operand 1, single buffered']
    #allocation5 [shape = 's32[1]{0}', space=sflag, size = 0x4, scoped, tag = 'scoped memory for tpu_custom_call.1']
    %11 = vsyncpa [#allocation3], 0
    %s12 = scalar_lea.sflag [#allocation3], 1
    %13 = vsyncpa %s12, 0
    %14 = vsyncpa [#allocation5], 0
    loop: start=0, step=1, limit=5
    $region2: #{tpu_custom_call.1} parent=1 // loop_pre_header
      _
    $region3: #{tpu_custom_call.1} parent=1 // loop_header
      %s16 = sphi 0, %s20
      %p17 = scmp.ge.s32.totalorder %s16, 5
      %s26 = sphi 0, %s28
      %s29 = sphi 0, %s26
      %s30 = sphi 0, %s29
      %s46 = sphi 0, %s30
      %s50 = sphi 0, %s50
      %s52 = sphi 0, %s50
      %s53 = sphi 0, %s52
      %s67 = sphi 0, %s53
      %s71 = sphi 0, %s71
      %s73 = sphi 0, %s71
      %s74 = sphi 0, %s73
      %s88 = sphi 0, %s74
      %s92 = sphi 0, %s92
      %s94 = sphi 0, %s92
      %s95 = sphi 0, %s94
      %s109 = sphi 0, %s95
      %s113 = sphi 0, %s113
      %s115 = sphi 0, %s113
      %s116 = sphi 0, %s115
      %s130 = sphi 0, %s116
      %s134 = sphi 0, %s134
      %s136 = sphi 0, %s134
      %s137 = sphi 0, %s136
      %s151 = sphi 0, %s137
      %s157 = sphi 0, %s159
      %s160 = sphi 0, %s157
      %s161 = sphi 0, %s160
      %s177 = sphi 0, %s161
    $region4: #{tpu_custom_call.1} parent=1 // loop_header_branch
      %19 = sbr.rel (%p17) target = $region8
    $region5: #{tpu_custom_call.1} parent=1 // loop_body
      %s21 = ssub.s32 %s16, 1
      %s22 = ssub.s32 %s16, 2
      %s23 = sadd.s32 %s16, 1
      %s24 = ssub.s32 %s16, %s23
      %p25 = scmp.eq.s32.totalorder %s24, 0
      %s27 = sadd.s32 %s26, 1
      %s28 = scalar_select %p25, %s26, %s27
      %p31 = pneg %p25
      %p32 = scmp.eq.s32.totalorder %s16, 2
      %p33 = por %p31, %p32
      %p34 = scmp.ne.s32.totalorder %s26, %s29
      %p35 = scmp.eq.s32.totalorder %s16, 0
      %p36 = por %p34, %p35
      %p37 = scmp.ne.s32.totalorder %s26, %s29
      %p38 = scmp.eq.s32.totalorder %s21, 2
      %p39 = por %p37, %p38
      %p40 = scmp.ne.s32.totalorder %s29, %s30
      %p41 = scmp.eq.s32.totalorder %s21, 0
      %p42 = por %p40, %p41
      %p43 = scmp.ne.s32.totalorder %s29, %s30
      %p44 = scmp.eq.s32.totalorder %s22, 2
      %p45 = por %p43, %p44
      %p47 = scmp.ne.s32.totalorder %s30, %s46
      %p48 = scmp.eq.s32.totalorder %s22, 0
      %p49 = por %p47, %p48
      %s51 = sadd.s32 %s50, 1
      %p54 = scmp.eq.s32.totalorder %s16, 2
      %p55 = scmp.ne.s32.totalorder %s50, %s52
      %p56 = scmp.eq.s32.totalorder %s16, 0
      %p57 = por %p55, %p56
      %p58 = scmp.ne.s32.totalorder %s50, %s52
      %p59 = scmp.eq.s32.totalorder %s21, 2
      %p60 = por %p58, %p59
      %p61 = scmp.ne.s32.totalorder %s52, %s53
      %p62 = scmp.eq.s32.totalorder %s21, 0
      %p63 = por %p61, %p62
      %p64 = scmp.ne.s32.totalorder %s52, %s53
      %p65 = scmp.eq.s32.totalorder %s22, 2
      %p66 = por %p64, %p65
      %p68 = scmp.ne.s32.totalorder %s53, %s67
      %p69 = scmp.eq.s32.totalorder %s22, 0
      %p70 = por %p68, %p69
      %s72 = sadd.s32 %s71, 1
      %p75 = scmp.eq.s32.totalorder %s16, 2
      %p76 = scmp.ne.s32.totalorder %s71, %s73
      %p77 = scmp.eq.s32.totalorder %s16, 0
      %p78 = por %p76, %p77
      %p79 = scmp.ne.s32.totalorder %s71, %s73
      %p80 = scmp.eq.s32.totalorder %s21, 2
      %p81 = por %p79, %p80
      %p82 = scmp.ne.s32.totalorder %s73, %s74
      %p83 = scmp.eq.s32.totalorder %s21, 0
      %p84 = por %p82, %p83
      %p85 = scmp.ne.s32.totalorder %s73, %s74
      %p86 = scmp.eq.s32.totalorder %s22, 2
      %p87 = por %p85, %p86
      %p89 = scmp.ne.s32.totalorder %s74, %s88
      %p90 = scmp.eq.s32.totalorder %s22, 0
      %p91 = por %p89, %p90
      %s93 = sadd.s32 %s92, 1
      %p96 = scmp.eq.s32.totalorder %s16, 2
      %p97 = scmp.ne.s32.totalorder %s92, %s94
      %p98 = scmp.eq.s32.totalorder %s16, 0
      %p99 = por %p97, %p98
      %p100 = scmp.ne.s32.totalorder %s92, %s94
      %p101 = scmp.eq.s32.totalorder %s21, 2
      %p102 = por %p100, %p101
      %p103 = scmp.ne.s32.totalorder %s94, %s95
      %p104 = scmp.eq.s32.totalorder %s21, 0
      %p105 = por %p103, %p104
      %p106 = scmp.ne.s32.totalorder %s94, %s95
      %p107 = scmp.eq.s32.totalorder %s22, 2
      %p108 = por %p106, %p107
      %p110 = scmp.ne.s32.totalorder %s95, %s109
      %p111 = scmp.eq.s32.totalorder %s22, 0
      %p112 = por %p110, %p111
      %s114 = sadd.s32 %s113, 1
      %p117 = scmp.eq.s32.totalorder %s16, 2
      %p118 = scmp.ne.s32.totalorder %s113, %s115
      %p119 = scmp.eq.s32.totalorder %s16, 0
      %p120 = por %p118, %p119
      %p121 = scmp.ne.s32.totalorder %s113, %s115
      %p122 = scmp.eq.s32.totalorder %s21, 2
      %p123 = por %p121, %p122
      %p124 = scmp.ne.s32.totalorder %s115, %s116
      %p125 = scmp.eq.s32.totalorder %s21, 0
      %p126 = por %p124, %p125
      %p127 = scmp.ne.s32.totalorder %s115, %s116
      %p128 = scmp.eq.s32.totalorder %s22, 2
      %p129 = por %p127, %p128
      %p131 = scmp.ne.s32.totalorder %s116, %s130
      %p132 = scmp.eq.s32.totalorder %s22, 0
      %p133 = por %p131, %p132
      %s135 = sadd.s32 %s134, 1
      %p138 = scmp.eq.s32.totalorder %s16, 2
      %p139 = scmp.ne.s32.totalorder %s134, %s136
      %p140 = scmp.eq.s32.totalorder %s16, 0
      %p141 = por %p139, %p140
      %p142 = scmp.ne.s32.totalorder %s134, %s136
      %p143 = scmp.eq.s32.totalorder %s21, 2
      %p144 = por %p142, %p143
      %p145 = scmp.ne.s32.totalorder %s136, %s137
      %p146 = scmp.eq.s32.totalorder %s21, 0
      %p147 = por %p145, %p146
      %p148 = scmp.ne.s32.totalorder %s136, %s137
      %p149 = scmp.eq.s32.totalorder %s22, 2
      %p150 = por %p148, %p149
      %p152 = scmp.ne.s32.totalorder %s137, %s151
      %p153 = scmp.eq.s32.totalorder %s22, 0
      %p154 = por %p152, %p153
      %s155 = ssub.s32 %s16, %s23
      %p156 = scmp.eq.s32.totalorder %s155, 0
      %s158 = sadd.s32 %s157, 1
      %s159 = scalar_select %p156, %s157, %s158
      %p162 = pneg %p156
      %p163 = scmp.eq.s32.totalorder %s16, 2
      %p164 = por %p162, %p163
      %p165 = scmp.ne.s32.totalorder %s157, %s160
      %p166 = scmp.eq.s32.totalorder %s16, 0
      %p167 = por %p165, %p166
      %p168 = scmp.ne.s32.totalorder %s157, %s160
      %p169 = scmp.eq.s32.totalorder %s21, 2
      %p170 = por %p168, %p169
      %p171 = scmp.ne.s32.totalorder %s160, %s161
      %p172 = scmp.eq.s32.totalorder %s21, 0
      %p173 = por %p171, %p172
      %p174 = scmp.ne.s32.totalorder %s160, %s161
      %p175 = scmp.eq.s32.totalorder %s22, 2
      %p176 = por %p174, %p175
      %p178 = scmp.ne.s32.totalorder %s161, %s177
      %p179 = scmp.eq.s32.totalorder %s22, 0
      %p180 = por %p178, %p179
      %p181 = scmp.le.s32.totalorder 1, %s16
      %p182 = scmp.lt.s32.totalorder %s16, 4
      %p183 = pnand %p181, %p182
      %p184 = pneg %p183
      // Predicated region
      $region9: #{tpu_custom_call.1} parent=5 // pred_check
        _
      $region10: #{tpu_custom_call.1} parent=5 // pred_check_branch
        %186 = sbr.rel (%p183) target = $region12
      $region11: #{tpu_custom_call.1} parent=5 // pred_region
        %s187 = ssub.s32 %s16, 1
        // Predicated region
        $region13: #{tpu_custom_call.1} parent=11 // pred_check
          %p188 = pneg %p63
        $region14: #{tpu_custom_call.1} parent=11 // pred_check_branch
          %190 = sbr.rel (%p188) target = $region16
        $region15: #{tpu_custom_call.1} parent=11 // pred_region
          %s192 = ssub.s32 512, 512
          %193 = vsyncadd [#allocation5], %s192
          %s194 = sshll.u32 [#allocation4], 4
          %s195 = int_to_ptr.vmem [resolvable:$true] %s194
          %200 = dma.hbm_to_vmem [thread:$0]  %s1, 512, %s195, [#allocation5], 128, 128, 8
        $region16: #{tpu_custom_call.1} parent=11 // pred_fallthru
          _
        // Predicated region
        $region17: #{tpu_custom_call.1} parent=11 // pred_check
          %p201 = pneg %p84
        $region18: #{tpu_custom_call.1} parent=11 // pred_check_branch
          %203 = sbr.rel (%p201) target = $region20
        $region19: #{tpu_custom_call.1} parent=11 // pred_region
          _
        $region20: #{tpu_custom_call.1} parent=11 // pred_fallthru
          _
        // Predicated region
        $region21: #{tpu_custom_call.1} parent=11 // pred_check
          %p204 = pneg %p105
        $region22: #{tpu_custom_call.1} parent=11 // pred_check_branch
          %206 = sbr.rel (%p204) target = $region24
        $region23: #{tpu_custom_call.1} parent=11 // pred_region
          _
        $region24: #{tpu_custom_call.1} parent=11 // pred_fallthru
          _
        // Predicated region
        $region25: #{tpu_custom_call.1} parent=11 // pred_check
          %p207 = pneg %p126
        $region26: #{tpu_custom_call.1} parent=11 // pred_check_branch
          %209 = sbr.rel (%p207) target = $region28
        $region27: #{tpu_custom_call.1} parent=11 // pred_region
          _
        $region28: #{tpu_custom_call.1} parent=11 // pred_fallthru
          _
        // Predicated region
        $region29: #{tpu_custom_call.1} parent=11 // pred_check
          %p210 = pneg %p147
        $region30: #{tpu_custom_call.1} parent=11 // pred_check_branch
          %212 = sbr.rel (%p210) target = $region32
        $region31: #{tpu_custom_call.1} parent=11 // pred_region
          _
        $region32: #{tpu_custom_call.1} parent=11 // pred_fallthru
          _
      $region12: #{tpu_custom_call.1} parent=5 // pred_fallthru
        _
      %p213 = scmp.lt.s32.totalorder %s16, 3
      // Predicated region
      $region33: #{tpu_custom_call.1} parent=5 // pred_check
        %p214 = pneg %p213
      $region34: #{tpu_custom_call.1} parent=5 // pred_check_branch
        %216 = sbr.rel (%p214) target = $region36
      $region35: #{tpu_custom_call.1} parent=5 // pred_region
        // Predicated region
        $region37: #{tpu_custom_call.1} parent=35 // pred_check
          %p217 = pneg %p36
        $region38: #{tpu_custom_call.1} parent=35 // pred_check_branch
          %219 = sbr.rel (%p217) target = $region40
        $region39: #{tpu_custom_call.1} parent=35 // pred_region
          %s220 = sand.u32 %s26, 1
          %s221 = scalar_lea.sflag [#allocation3], %s220
          %s222 = sand.u32 %s26, 1
          %s223 = smul.addr %s222, 8
          %s224 = scalar_lea.vmem [#allocation2], %s223
          %s226 = ssub.s32 128, 128
          %227 = vsyncadd %s221, %s226
          %s228 = smul.addr %s16, 128
          %s229 = scalar_lea.hbm %s0, %s228
          %s231 = sshll.u32 %s224, 4
          %s232 = int_to_ptr.vmem [resolvable:$true] %s231
          %234 = dma.hbm_to_vmem [thread:$0]  %s229, 128, %s232, %s221
        $region40: #{tpu_custom_call.1} parent=35 // pred_fallthru
          _
      $region36: #{tpu_custom_call.1} parent=5 // pred_fallthru
        _
      %p235 = scmp.le.s32.totalorder 1, %s16
      %p236 = scmp.lt.s32.totalorder %s16, 4
      %p237 = pnand %p235, %p236
      %p238 = pneg %p237
      // Predicated region
      $region41: #{tpu_custom_call.1} parent=5 // pred_check
        _
      $region42: #{tpu_custom_call.1} parent=5 // pred_check_branch
        %240 = sbr.rel (%p237) target = $region44
      $region43: #{tpu_custom_call.1} parent=5 // pred_region
        %s241 = ssub.s32 %s16, 1
        %s242 = sand.u32 %s29, 1
        %s243 = scalar_lea.sflag [#allocation3], %s242
        %s244 = sand.u32 %s29, 1
        %s245 = smul.addr %s244, 8
        %s246 = scalar_lea.vmem [#allocation2], %s245
        // Predicated region
        $region45: #{tpu_custom_call.1} parent=43 // pred_check
          %p247 = pneg %p42
        $region46: #{tpu_custom_call.1} parent=43 // pred_check_branch
          %249 = sbr.rel (%p247) target = $region48
        $region47: #{tpu_custom_call.1} parent=43 // pred_region
          %250 = dma.done %s243, 128
        $region48: #{tpu_custom_call.1} parent=43 // pred_fallthru
          _
        // Predicated region
        $region49: #{tpu_custom_call.1} parent=43 // pred_check
          %p251 = pneg %p63
        $region50: #{tpu_custom_call.1} parent=43 // pred_check_branch
          %253 = sbr.rel (%p251) target = $region52
        $region51: #{tpu_custom_call.1} parent=43 // pred_region
          %254 = dma.done [#allocation5], 512
        $region52: #{tpu_custom_call.1} parent=43 // pred_fallthru
          _
        %s255 = sand.u32 %s29, 1
        %s256 = scalar_lea.sflag [#allocation3], %s255
        %s257 = sand.u32 %s29, 1
        %s258 = smul.addr %s257, 8
        %s259 = scalar_lea.vmem [#allocation2], %s258
        %p260 = pneg %p42
        %p261 = pneg %p39
        %p262 = pneg %p63
        %p263 = pneg %p60
        %p264 = pneg %p84
        %p265 = pneg %p81
        %p266 = pneg %p105
        %p267 = pneg %p102
        %p268 = pneg %p126
        %p269 = pneg %p123
        %p270 = pneg %p147
        %p271 = pneg %p144
        %p272 = pneg %p173
        %p273 = pneg %p170
        %p274 = scmp.lt.s32.totalorder %s21, 2
        %s275 = scalar_select %p274, %s21, 2
        %s276 = smul.addr %s275, 8
        %s277 = scalar_lea.vmem %s6, %s276
        %p278 = scmp.lt.s32.totalorder %s21, 2
        %s279 = scalar_select %p278, %s21, 2
        %s280 = smul.addr %s279, 8
        %s281 = scalar_lea.vmem %s6, %s280
        %v282 = vld [vmem:[%s246] sm:$0xff]
        %v283 = vld [vmem:[#allocation4] sm:$0xff]
        %v284 = vld [vmem:[#allocation4 + $0x8] sm:$0xff]
        %v285 = vld [vmem:[#allocation4 + $0x10] sm:$0xff]
        %v286 = vld [vmem:[#allocation4 + $0x18] sm:$0xff]
        %v287 = vld [vmem:[%s2] sm:$0x1]
        %vm288 = vcmask 261120
        %v290 = vsel %vm288, %v282, 0
        %292 = vmatprep.subr.mxu0 0.0
        %293 = vmatpush1.msra.mxu0 0.0
        %294 = vmatprep.subr.mxu0 0.0
        %295 = vmatpush1.msra.mxu0 0.0
        %296 = vmatprep.subr.mxu0 0.0
        %297 = vmatpush1.msra.mxu0 0.0
        %298 = vmatprep.subr.mxu0 0.0
        %299 = vmatpush1.msra.mxu0 0.0
        %300 = vmatprep.subr.mxu0 0.0
        %301 = vmatpush1.msra.mxu0 0.0
        %302 = vmatprep.subr.mxu0 0.0
        %303 = vmatpush1.msra.mxu0 0.0
        %304 = vmatprep.subr.mxu0 0.0
        %305 = vmatpush1.msra.mxu0 0.0
        %306 = vmatprep.subr.mxu0 0.0
        %307 = vmatpush1.msra.mxu0 0.0
        %308 = vmatprep.subr.mxu0 0.0
        %309 = vmatpush1.msra.mxu0 0.0
        %310 = vmatprep.subr.mxu0 0.0
        %311 = vmatpush1.msra.mxu0 0.0
        %312 = vmatprep.subr.mxu0 0.0
        %313 = vmatpush1.msra.mxu0 0.0
        %314 = vmatprep.subr.mxu0 0.0
        %315 = vmatpush1.msra.mxu0 0.0
        %316 = vmatprep.subr.mxu0 0.0
        %317 = vmatpush1.msra.mxu0 %v286
        %318 = vmatprep.subr.mxu0 0.0
        %319 = vmatpush1.msra.mxu0 %v285
        %320 = vmatprep.subr.mxu0 0.0
        %321 = vmatpush1.msra.mxu0 %v284
        %322 = vmatprep.subr.mxu0 0.0
        %323 = vmatpush1.msra.mxu0 %v283
        %324 = vmatprep.subr.mxu0 0.0
        %325 = vmatpush2.msra.mxu0 0.0
        %326 = vmatprep.subr.mxu0 0.0
        %327 = vmatpush2.msra.mxu0 0.0
        %328 = vmatprep.subr.mxu0 0.0
        %329 = vmatpush2.msra.mxu0 0.0
        %330 = vmatprep.subr.mxu0 0.0
        %331 = vmatpush2.msra.mxu0 0.0
        %332 = vmatprep.subr.mxu0 0.0
        %333 = vmatpush2.msra.mxu0 0.0
        %334 = vmatprep.subr.mxu0 0.0
        %335 = vmatpush2.msra.mxu0 0.0
        %336 = vmatprep.subr.mxu0 0.0
        %337 = vmatpush2.msra.mxu0 0.0
        %338 = vmatprep.subr.mxu0 0.0
        %339 = vmatpush2.msra.mxu0 0.0
        %340 = vmatprep.subr.mxu0 0.0
        %341 = vmatpush2.msra.mxu0 0.0
        %342 = vmatprep.subr.mxu0 0.0
        %343 = vmatpush2.msra.mxu0 0.0
        %344 = vmatprep.subr.mxu0 0.0
        %345 = vmatpush2.msra.mxu0 0.0
        %346 = vmatprep.subr.mxu0 0.0
        %347 = vmatpush2.msra.mxu0 0.0
        %348 = vmatprep.subr.mxu0 0.0
        %349 = vmatpush2.msra.mxu0 0.0
        %350 = vmatprep.subr.mxu0 0.0
        %351 = vmatpush2.msra.mxu0 0.0
        %352 = vmatprep.subr.mxu0 0.0
        %353 = vmatpush2.msra.mxu0 0.0
        %354 = vmatprep.subr.mxu0 0.0
        %355 = vmatpush2.msra.mxu0 0.0
        %356 = vmatprep.mubr.f32.mxu0 0.0
        %357 = vmatmul.mubr.f32.gmra.mxu0 %v290
        %v358 = vpop.f32.mrf.mxu0
        %v359 = vadd.f32 0.0, %v358
        %v360 = vpop.f32.mrf.mxu0
        %361 = vdwg.mxu0
        %v363 = vlaneseq
        %v364 = vshrl.u32 %v363, 7
        %v365 = vsub.s32 0, %v364
        %v366 = vrot.slane %v287, %v365
        %v368 = vadd.f32 %v359, %v366
        %v369 = vmul.f32 %v368, 0.5
        %v370 = vmul.f32 %v368, 0.70710677
        %v371 = verf.f32.pop %v370
        %v372 = vadd.f32 %v371, 1.0
        %v373 = vmul.f32 %v369, %v372
        %375 = vrot.lane.b32.xlu0 %v359, 64
        %v376 = vpop.permute.xlu0 %375
        %v378 = vadd.f32 %v373, %v376
        %v379 = vld [vmem:[%s3] sm:$0xff]
        %v380 = vld [vmem:[%s3 + $0x8] sm:$0xff]
        %v381 = vld [vmem:[%s3 + $0x10] sm:$0xff]
        %v382 = vld [vmem:[%s3 + $0x18] sm:$0xff]
        %v383 = vld [vmem:[%s3 + $0x20] sm:$0xff]
        %v384 = vld [vmem:[%s3 + $0x28] sm:$0xff]
        %v385 = vld [vmem:[%s3 + $0x30] sm:$0xff]
        %v386 = vld [vmem:[%s3 + $0x38] sm:$0xff]
        %v387 = vld [vmem:[%s4] sm:$0x1]
        %vm388 = vcmask 523264
        %v390 = vsel %vm388, %v378, 0
        %392 = vmatprep.subr.mxu0 0.0
        %393 = vmatpush1.msra.mxu0 0.0
        %394 = vmatprep.subr.mxu0 0.0
        %395 = vmatpush1.msra.mxu0 0.0
        %396 = vmatprep.subr.mxu0 0.0
        %397 = vmatpush1.msra.mxu0 0.0
        %398 = vmatprep.subr.mxu0 0.0
        %399 = vmatpush1.msra.mxu0 0.0
        %400 = vmatprep.subr.mxu0 0.0
        %401 = vmatpush1.msra.mxu0 0.0
        %402 = vmatprep.subr.mxu0 0.0
        %403 = vmatpush1.msra.mxu0 0.0
        %404 = vmatprep.subr.mxu0 0.0
        %405 = vmatpush1.msra.mxu0 0.0
        %406 = vmatprep.subr.mxu0 0.0
        %407 = vmatpush1.msra.mxu0 0.0
        %408 = vmatprep.subr.mxu0 0.0
        %409 = vmatpush1.msra.mxu0 %v386
        %410 = vmatprep.subr.mxu0 0.0
        %411 = vmatpush1.msra.mxu0 %v385
        %412 = vmatprep.subr.mxu0 0.0
        %413 = vmatpush1.msra.mxu0 %v384
        %414 = vmatprep.subr.mxu0 0.0
        %415 = vmatpush1.msra.mxu0 %v383
        %416 = vmatprep.subr.mxu0 0.0
        %417 = vmatpush1.msra.mxu0 %v382
        %418 = vmatprep.subr.mxu0 0.0
        %419 = vmatpush1.msra.mxu0 %v381
        %420 = vmatprep.subr.mxu0 0.0
        %421 = vmatpush1.msra.mxu0 %v380
        %422 = vmatprep.subr.mxu0 0.0
        %423 = vmatpush1.msra.mxu0 %v379
        %424 = vmatprep.subr.mxu0 0.0
        %425 = vmatpush2.msra.mxu0 0.0
        %426 = vmatprep.subr.mxu0 0.0
        %427 = vmatpush2.msra.mxu0 0.0
        %428 = vmatprep.subr.mxu0 0.0
        %429 = vmatpush2.msra.mxu0 0.0
        %430 = vmatprep.subr.mxu0 0.0
        %431 = vmatpush2.msra.mxu0 0.0
        %432 = vmatprep.subr.mxu0 0.0
        %433 = vmatpush2.msra.mxu0 0.0
        %434 = vmatprep.subr.mxu0 0.0
        %435 = vmatpush2.msra.mxu0 0.0
        %436 = vmatprep.subr.mxu0 0.0
        %437 = vmatpush2.msra.mxu0 0.0
        %438 = vmatprep.subr.mxu0 0.0
        %439 = vmatpush2.msra.mxu0 0.0
        %440 = vmatprep.subr.mxu0 0.0
        %441 = vmatpush2.msra.mxu0 0.0
        %442 = vmatprep.subr.mxu0 0.0
        %443 = vmatpush2.msra.mxu0 0.0
        %444 = vmatprep.subr.mxu0 0.0
        %445 = vmatpush2.msra.mxu0 0.0
        %446 = vmatprep.subr.mxu0 0.0
        %447 = vmatpush2.msra.mxu0 0.0
        %448 = vmatprep.subr.mxu0 0.0
        %449 = vmatpush2.msra.mxu0 0.0
        %450 = vmatprep.subr.mxu0 0.0
        %451 = vmatpush2.msra.mxu0 0.0
        %452 = vmatprep.subr.mxu0 0.0
        %453 = vmatpush2.msra.mxu0 0.0
        %454 = vmatprep.subr.mxu0 0.0
        %455 = vmatpush2.msra.mxu0 0.0
        %456 = vmatprep.mubr.f32.mxu0 0.0
        %457 = vmatmul.mubr.f32.gmra.mxu0 %v390
        %v458 = vpop.f32.mrf.mxu0
        %v459 = vadd.f32 0.0, %v458
        %v460 = vpop.f32.mrf.mxu0
        %461 = vdwg.mxu0
        %v463 = vlaneseq
        %v464 = vshrl.u32 %v463, 7
        %v465 = vsub.s32 0, %v464
        %v466 = vrot.slane %v387, %v465
        %v468 = vadd.f32 %v459, %v466
        %v469 = vmul.f32 %v468, 0.5
        %v470 = vmul.f32 %v468, 0.70710677
        %v471 = verf.f32.pop %v470
        %v472 = vadd.f32 %v471, 1.0
        %v473 = vmul.f32 %v469, %v472
        %475 = vrot.lane.b32.xlu0 %v459, 64
        %v476 = vpop.permute.xlu0 %475
        %v478 = vadd.f32 %v473, %v476
        %v479 = vld [vmem:[%s5] sm:$0xff]
        %v480 = vld [vmem:[%s5 + $0x8] sm:$0xff]
        %v481 = vld [vmem:[%s5 + $0x10] sm:$0xff]
        %v482 = vld [vmem:[%s5 + $0x18] sm:$0xff]
        %v483 = vld [vmem:[%s5 + $0x20] sm:$0xff]
        %v484 = vld [vmem:[%s5 + $0x28] sm:$0xff]
        %v485 = vld [vmem:[%s5 + $0x30] sm:$0xff]
        %v486 = vld [vmem:[%s5 + $0x38] sm:$0xff]
        %v488 = vsel %vm388, %v478, 0
        %490 = vmatprep.subr.mxu0 0.0
        %491 = vmatpush1.msra.mxu0 0.0
        %492 = vmatprep.subr.mxu0 0.0
        %493 = vmatpush1.msra.mxu0 0.0
        %494 = vmatprep.subr.mxu0 0.0
        %495 = vmatpush1.msra.mxu0 0.0
        %496 = vmatprep.subr.mxu0 0.0
        %497 = vmatpush1.msra.mxu0 0.0
        %498 = vmatprep.subr.mxu0 0.0
        %499 = vmatpush1.msra.mxu0 0.0
        %500 = vmatprep.subr.mxu0 0.0
        %501 = vmatpush1.msra.mxu0 0.0
        %502 = vmatprep.subr.mxu0 0.0
        %503 = vmatpush1.msra.mxu0 0.0
        %504 = vmatprep.subr.mxu0 0.0
        %505 = vmatpush1.msra.mxu0 0.0
        %506 = vmatprep.subr.mxu0 0.0
        %507 = vmatpush1.msra.mxu0 %v486
        %508 = vmatprep.subr.mxu0 0.0
        %509 = vmatpush1.msra.mxu0 %v485
        %510 = vmatprep.subr.mxu0 0.0
        %511 = vmatpush1.msra.mxu0 %v484
        %512 = vmatprep.subr.mxu0 0.0
        %513 = vmatpush1.msra.mxu0 %v483
        %514 = vmatprep.subr.mxu0 0.0
        %515 = vmatpush1.msra.mxu0 %v482
        %516 = vmatprep.subr.mxu0 0.0
        %517 = vmatpush1.msra.mxu0 %v481
        %518 = vmatprep.subr.mxu0 0.0
        %519 = vmatpush1.msra.mxu0 %v480
        %520 = vmatprep.subr.mxu0 0.0
        %521 = vmatpush1.msra.mxu0 %v479
        %522 = vmatprep.subr.mxu0 0.0
        %523 = vmatpush2.msra.mxu0 0.0
        %524 = vmatprep.subr.mxu0 0.0
        %525 = vmatpush2.msra.mxu0 0.0
        %526 = vmatprep.subr.mxu0 0.0
        %527 = vmatpush2.msra.mxu0 0.0
        %528 = vmatprep.subr.mxu0 0.0
        %529 = vmatpush2.msra.mxu0 0.0
        %530 = vmatprep.subr.mxu0 0.0
        %531 = vmatpush2.msra.mxu0 0.0
        %532 = vmatprep.subr.mxu0 0.0
        %533 = vmatpush2.msra.mxu0 0.0
        %534 = vmatprep.subr.mxu0 0.0
        %535 = vmatpush2.msra.mxu0 0.0
        %536 = vmatprep.subr.mxu0 0.0
        %537 = vmatpush2.msra.mxu0 0.0
        %538 = vmatprep.subr.mxu0 0.0
        %539 = vmatpush2.msra.mxu0 0.0
        %540 = vmatprep.subr.mxu0 0.0
        %541 = vmatpush2.msra.mxu0 0.0
        %542 = vmatprep.subr.mxu0 0.0
        %543 = vmatpush2.msra.mxu0 0.0
        %544 = vmatprep.subr.mxu0 0.0
        %545 = vmatpush2.msra.mxu0 0.0
        %546 = vmatprep.subr.mxu0 0.0
        %547 = vmatpush2.msra.mxu0 0.0
        %548 = vmatprep.subr.mxu0 0.0
        %549 = vmatpush2.msra.mxu0 0.0
        %550 = vmatprep.subr.mxu0 0.0
        %551 = vmatpush2.msra.mxu0 0.0
        %552 = vmatprep.subr.mxu0 0.0
        %553 = vmatpush2.msra.mxu0 0.0
        %554 = vmatprep.mubr.f32.mxu0 0.0
        %555 = vmatmul.mubr.f32.gmra.mxu0 %v488
        %v556 = vpop.f32.mrf.mxu0
        %v557 = vadd.f32 0.0, %v556
        %v558 = vpop.f32.mrf.mxu0
        %559 = vdwg.mxu0
        %vm560 = vcmask 130048
        %561 = vst.msk [vmem:[%s281] sm:$0xff] %vm560, %v557
        %p562 = scmp.lt.s32.totalorder %s21, 2
        %s563 = scalar_select %p562, %s21, 2
        %s564 = smul.addr %s563, 8
        %s565 = scalar_lea.vmem %s6, %s564
        // Predicated region
        $region53: #{tpu_custom_call.1} parent=43 // pred_check
          %p566 = pneg %p170
        $region54: #{tpu_custom_call.1} parent=43 // pred_check_branch
          %568 = sbr.rel (%p566) target = $region56
        $region55: #{tpu_custom_call.1} parent=43 // pred_region
          _
        $region56: #{tpu_custom_call.1} parent=43 // pred_fallthru
          _
      $region44: #{tpu_custom_call.1} parent=5 // pred_fallthru
        _
      %p569 = scmp.le.s32.totalorder 2, %s16
      // Predicated region
      $region57: #{tpu_custom_call.1} parent=5 // pred_check
        %p570 = pneg %p569
      $region58: #{tpu_custom_call.1} parent=5 // pred_check_branch
        %572 = sbr.rel (%p570) target = $region60
      $region59: #{tpu_custom_call.1} parent=5 // pred_region
        %s573 = ssub.s32 %s16, 2
        // Predicated region
        $region61: #{tpu_custom_call.1} parent=59 // pred_check
          %p574 = pneg %p176
        $region62: #{tpu_custom_call.1} parent=59 // pred_check_branch
          %576 = sbr.rel (%p574) target = $region64
        $region63: #{tpu_custom_call.1} parent=59 // pred_region
          %p577 = scmp.lt.s32.totalorder %s22, 2
          %s578 = scalar_select %p577, %s22, 2
          %s579 = smul.addr %s578, 8
          %s580 = scalar_lea.vmem %s6, %s579
        $region64: #{tpu_custom_call.1} parent=59 // pred_fallthru
          _
      $region60: #{tpu_custom_call.1} parent=5 // pred_fallthru
        _
    $region6: #{tpu_custom_call.1} parent=1 // loop_footer
      %s20 = sadd.s32 1, %s16
    $region7: #{tpu_custom_call.1} parent=1 // loop_footer_branch
      %15 = sbr.rel target = $region3
    $region8: #{tpu_custom_call.1} parent=1 // loop_exit
      _
    %581 = vsyncpa [#allocation3], 1
    %s582 = scalar_lea.sflag [#allocation3], 1
    %583 = vsyncpa %s582, 1
    %584 = vsyncpa [#allocation5], 1

</llo_original>
